<compile_context>
chip_gen: v5e
topology: v5e:2x2
jax: 0.10.0
libtpu: 0.0.40
codegen_flags: <defaults>
</compile_context>

<pallas_src>
import functools

import jax
import jax.numpy as jnp
from jax.experimental import pallas as pl
from jax.experimental.pallas import tpu as pltpu


def _channel_attention_kernel(x_ref, w1_ref, b1_ref, w2_ref, b2_ref, out_ref,
                              sum_scratch, max_scratch,
                              *, hw_total, hw_tile, b_tile):
    # x_ref:  (b_tile, C, hw_tile)   current spatial tile of the batch block
    # w1_ref: (C, mid)   b1_ref: (1, mid)
    # w2_ref: (mid, C)   b2_ref: (1, C)
    # out_ref:(b_tile, C)
    s = pl.program_id(1)
    n_s = pl.num_programs(1)

    # ---- init running reductions at the first spatial tile of this batch block
    @pl.when(s == 0)
    def _():
        sum_scratch[...] = jnp.zeros_like(sum_scratch)
        max_scratch[...] = jnp.full_like(max_scratch, -jnp.inf)

    # ---- accumulate this spatial tile (one lane reduce each for sum/max,
    #      scratch update is pure elementwise VPU work)
    x_f32 = x_ref[...].astype(jnp.float32)              # (b_tile, C, hw_tile)
    if hw_total % hw_tile != 0:
        # Mask padded lanes of the (partial) last tile: 0 for sum, -inf for max.
        lane = jax.lax.broadcasted_iota(jnp.int32, (1, 1, hw_tile), 2)
        valid = (s * hw_tile + lane) < hw_total
        x_sum_in = jnp.where(valid, x_f32, 0.0)
        x_max_in = jnp.where(valid, x_f32, -jnp.inf)
    else:
        x_sum_in = x_f32
        x_max_in = x_f32

    sum_scratch[...] += jnp.sum(x_sum_in, axis=-1)                       # (b_tile, C)
    max_scratch[...] = jnp.maximum(max_scratch[...], jnp.max(x_max_in, axis=-1))

    # ---- finalize: fused shared MLP on [avg ; max], sigmoid, store
    @pl.when(s == n_s - 1)
    def _():
        avg = sum_scratch[...] / jnp.float32(hw_total)   # == AdaptiveAvgPool2d(1)
        mx = max_scratch[...]                            # == AdaptiveMaxPool2d(1)
        pooled = jnp.concatenate([avg, mx], axis=0)      # (2*b_tile, C): one MLP pass
        h = jnp.dot(pooled, w1_ref[...], preferred_element_type=jnp.float32) + b1_ref[...]
        h = jnp.maximum(h, 0.0)                          # ReLU
        y = jnp.dot(h, w2_ref[...], preferred_element_type=jnp.float32) + b2_ref[...]
        logits = y[:b_tile] + y[b_tile:]                 # mlp(avg) + mlp(max)
        out_ref[...] = jax.nn.sigmoid(logits).astype(out_ref.dtype)


def _pick_hw_tile(b_tile, c, hw, itemsize, budget_bytes=4 * 1024 * 1024):
    """Largest lane tile (multiple of 128) whose x block stays under `budget_bytes`.

    ~4 MiB per block keeps the double-buffered x stream comfortably inside
    v7x's 64 MiB VMEM (and is still large enough to sit near the HBM roofline
    on v5e/v6e)."""
    max_elems = max(budget_bytes // (b_tile * c * itemsize), 128)
    if hw <= max_elems:
        return hw                         # single tile; last dim == full extent
    tile = (max_elems // 512) * 512       # prefer large lane-dense tiles
    if tile == 0:
        tile = (max_elems // 128) * 128
    return max(tile, 128)


def channel_attention(x, w1_t, b1, w2_t, b2, *, hw_tile=None,
                      vmem_limit_bytes=32 * 1024 * 1024):
    """x: [B, C, H, W] (NCHW). Returns the CBAM channel-attention map [B, C, 1, 1]."""
    B, C, H, W = x.shape
    mid = w1_t.shape[1]
    HW = H * W

    x_flat = x.reshape(B, C, HW)
    b1_2d = b1.reshape(1, mid)
    b2_2d = b2.reshape(1, C)

    # Batch tile: full batch if small / ragged, otherwise 8 (sublane friendly).
    b_tile = 8 if (B > 8 and B % 8 == 0) else B
    if hw_tile is None:
        hw_tile = _pick_hw_tile(b_tile, C, HW, x.dtype.itemsize)
    assert hw_tile == HW or hw_tile % 128 == 0, \
        "hw_tile must be a multiple of 128 or the full H*W"

    grid = (pl.cdiv(B, b_tile), pl.cdiv(HW, hw_tile))

    kernel = functools.partial(_channel_attention_kernel,
                               hw_total=HW, hw_tile=hw_tile, b_tile=b_tile)

    out = pl.pallas_call(
        kernel,
        out_shape=jax.ShapeDtypeStruct((B, C), x.dtype),
        grid=grid,
        in_specs=[
            # x: streamed over batch blocks and spatial tiles.
            pl.BlockSpec((b_tile, C, hw_tile), lambda b, s: (b, 0, s)),
            # weights / biases: grid-invariant -> constant index maps keep them resident.
            pl.BlockSpec((C, mid), lambda b, s: (0, 0)),
            pl.BlockSpec((1, mid), lambda b, s: (0, 0)),
            pl.BlockSpec((mid, C), lambda b, s: (0, 0)),
            pl.BlockSpec((1, C), lambda b, s: (0, 0)),
        ],
        out_specs=pl.BlockSpec((b_tile, C), lambda b, s: (b, 0)),
        scratch_shapes=[
            pltpu.VMEM((b_tile, C), jnp.float32),   # running sum
            pltpu.VMEM((b_tile, C), jnp.float32),   # running max
        ],
        compiler_params=pltpu.CompilerParams(
            dimension_semantics=("parallel", "arbitrary"),
            vmem_limit_bytes=vmem_limit_bytes,
        ),
    )(x_flat, w1_t, b1_2d, w2_t, b2_2d)

    return out.reshape(B, C, 1, 1)


def init_params(key, channel, reduction=16):
    """Deterministic synthetic init matching nn.Linear shapes.
    PyTorch Linear weight is (out, in); we store transposed (in, out) for y = x @ W.T + b."""
    mid = channel // reduction
    k1, k2, k3, k4 = jax.random.split(key, 4)
    w1_t = jax.random.normal(k1, (channel, mid), jnp.float32) * 0.1  # Linear(C, mid).weight.T
    b1 = jax.random.normal(k2, (mid,), jnp.float32) * 0.1
    w2_t = jax.random.normal(k3, (mid, channel), jnp.float32) * 0.1  # Linear(mid, C).weight.T
    b2 = jax.random.normal(k4, (channel,), jnp.float32) * 0.1
    return w1_t, b1, w2_t, b2


def reference(x, w1_t, b1, w2_t, b2):
    """Pure-JAX reference mirroring the PyTorch forward."""
    B, C, H, W = x.shape
    avg = jnp.mean(x, axis=(2, 3))
    mx = jnp.max(x, axis=(2, 3))

    def mlp(v):
        h = jnp.maximum(v @ w1_t + b1, 0.0)
        return h @ w2_t + b2

    return jax.nn.sigmoid(mlp(avg) + mlp(mx)).reshape(B, C, 1, 1)


if __name__ == "__main__":
    key = jax.random.PRNGKey(0)
    kx, kx2, kp = jax.random.split(key, 3)

    reduction = 16

    # Test 1: HW divisible by the tile -> exercises the multi-tile accumulation path.
    B, C, H, W = 2, 32, 16, 16            # channel=32, reduction=16 -> mid=2
    x = jax.random.normal(kx, (B, C, H, W), jnp.float32)
    w1_t, b1, w2_t, b2 = init_params(kp, C, reduction)

    out = channel_attention(x, w1_t, b1, w2_t, b2, hw_tile=128)  # 2 spatial tiles
    out = jax.block_until_ready(out)
    ref = reference(x, w1_t, b1, w2_t, b2)
    assert out.shape == (B, C, 1, 1), out.shape
    assert jnp.allclose(out, ref, atol=1e-5, rtol=1e-5), float(jnp.max(jnp.abs(out - ref)))

    # Test 2: ragged spatial extent -> exercises the masked last tile.
    H2, W2 = 15, 15                       # HW = 225, not a multiple of 128
    x2 = jax.random.normal(kx2, (B, C, H2, W2), jnp.float32)
    out2 = channel_attention(x2, w1_t, b1, w2_t, b2, hw_tile=128)
    out2 = jax.block_until_ready(out2)
    ref2 = reference(x2, w1_t, b1, w2_t, b2)
    assert jnp.allclose(out2, ref2, atol=1e-5, rtol=1e-5), float(jnp.max(jnp.abs(out2 - ref2)))

    print("KERNEL_OK")
</pallas_src>

<mosaic_0001>
module attributes {stable_mosaic.version = 11 : i64} {
  func.func @_channel_attention_kernel(%arg0: i32, %arg1: i32, %arg2: memref<2x32x128xf32, #tpu.memory_space<vmem>>, %arg3: memref<32x2xf32, #tpu.memory_space<vmem>>, %arg4: memref<1x2xf32, #tpu.memory_space<vmem>>, %arg5: memref<2x32xf32, #tpu.memory_space<vmem>>, %arg6: memref<1x32xf32, #tpu.memory_space<vmem>>, %arg7: memref<2x32xf32, #tpu.memory_space<vmem>>, %arg8: memref<2x32xf32, #tpu.memory_space<vmem>>, %arg9: memref<2x32xf32, #tpu.memory_space<vmem>>) attributes {dimension_semantics = [#tpu.dimension_semantics<parallel>, #tpu.dimension_semantics<arbitrary>], iteration_bounds = array<i64: 1, 2>, scalar_prefetch = 0 : i64, scratch_operands = 2 : i64, tpu.core_type = #tpu.core_type<tc>, window_params = [{transform_indices = @transform_0, window_bounds = array<i64: 2, 32, 128>}, {pipeline_mode = #tpu.pipeline_mode<synchronous>, transform_indices = @transform_1, window_bounds = array<i64: 32, 2>}, {pipeline_mode = #tpu.pipeline_mode<synchronous>, transform_indices = @transform_2, window_bounds = array<i64: 1, 2>}, {pipeline_mode = #tpu.pipeline_mode<synchronous>, transform_indices = @transform_3, window_bounds = array<i64: 2, 32>}, {pipeline_mode = #tpu.pipeline_mode<synchronous>, transform_indices = @transform_4, window_bounds = array<i64: 1, 32>}, {transform_indices = @transform_5, window_bounds = array<i64: 2, 32>}]} {
    %c0_i32 = arith.constant 0 : i32
    %0 = arith.cmpi eq, %arg1, %c0_i32 : i32
    %1 = arith.extui %0 : i1 to i32
    %c0_i32_0 = arith.constant 0 : i32
    %2 = arith.cmpi ne, %1, %c0_i32_0 : i32
    scf.if %2 {
      %cst_13 = arith.constant 0.000000e+00 : f32
      %15 = vector.broadcast %cst_13 : f32 to vector<2x32xf32>
      %c0_14 = arith.constant 0 : index
      %c0_15 = arith.constant 0 : index
      %16 = vector.load %arg8[%c0_14, %c0_15] : memref<2x32xf32, #tpu.memory_space<vmem>>, vector<2x32xf32>
      tpu.vector_store %arg8[%c0_14, %c0_15], %15 {strides = array<i32>} : memref<2x32xf32, #tpu.memory_space<vmem>>, vector<2x32xf32>,
      %cst_16 = arith.constant 0xFF800000 : f32
      %17 = vector.broadcast %cst_16 : f32 to vector<2x32xf32>
      %c0_17 = arith.constant 0 : index
      %c0_18 = arith.constant 0 : index
      %18 = vector.load %arg9[%c0_17, %c0_18] : memref<2x32xf32, #tpu.memory_space<vmem>>, vector<2x32xf32>
      tpu.vector_store %arg9[%c0_17, %c0_18], %17 {strides = array<i32>} : memref<2x32xf32, #tpu.memory_space<vmem>>, vector<2x32xf32>,
    } else {
    }
    %c0 = arith.constant 0 : index
    %c0_1 = arith.constant 0 : index
    %c0_2 = arith.constant 0 : index
    %3 = vector.load %arg2[%c0, %c0_1, %c0_2] : memref<2x32x128xf32, #tpu.memory_space<vmem>>, vector<2x32x128xf32>
    %c0_3 = arith.constant 0 : index
    %c0_4 = arith.constant 0 : index
    %4 = vector.load %arg8[%c0_3, %c0_4] : memref<2x32xf32, #tpu.memory_space<vmem>>, vector<2x32xf32>
    %cst = arith.constant dense<0.000000e+00> : vector<2x32xf32>
    %5 = vector.multi_reduction <add>, %3, %cst [2] : vector<2x32x128xf32> to vector<2x32xf32>
    %6 = arith.addf %4, %5 : vector<2x32xf32>
    %c0_5 = arith.constant 0 : index
    %c0_6 = arith.constant 0 : index
    %7 = vector.load %arg8[%c0_5, %c0_6] : memref<2x32xf32, #tpu.memory_space<vmem>>, vector<2x32xf32>
    tpu.vector_store %arg8[%c0_5, %c0_6], %6 {strides = array<i32>} : memref<2x32xf32, #tpu.memory_space<vmem>>, vector<2x32xf32>,
    %c0_7 = arith.constant 0 : index
    %c0_8 = arith.constant 0 : index
    %8 = vector.load %arg9[%c0_7, %c0_8] : memref<2x32xf32, #tpu.memory_space<vmem>>, vector<2x32xf32>
    %cst_9 = arith.constant dense<0xFF800000> : vector<2x32xf32>
    %9 = vector.multi_reduction <maximumf>, %3, %cst_9 [2] : vector<2x32x128xf32> to vector<2x32xf32>
    %10 = arith.maximumf %8, %9 : vector<2x32xf32>
    %c0_10 = arith.constant 0 : index
    %c0_11 = arith.constant 0 : index
    %11 = vector.load %arg9[%c0_10, %c0_11] : memref<2x32xf32, #tpu.memory_space<vmem>>, vector<2x32xf32>
    tpu.vector_store %arg9[%c0_10, %c0_11], %10 {strides = array<i32>} : memref<2x32xf32, #tpu.memory_space<vmem>>, vector<2x32xf32>,
    %c1_i32 = arith.constant 1 : i32
    %12 = arith.cmpi eq, %arg1, %c1_i32 : i32
    %13 = arith.extui %12 : i1 to i32
    %c0_i32_12 = arith.constant 0 : i32
    %14 = arith.cmpi ne, %13, %c0_i32_12 : i32
    scf.if %14 {
      %c0_13 = arith.constant 0 : index
      %c0_14 = arith.constant 0 : index
      %15 = vector.load %arg8[%c0_13, %c0_14] : memref<2x32xf32, #tpu.memory_space<vmem>>, vector<2x32xf32>
      %cst_15 = arith.constant 2.560000e+02 : f32
      %16 = vector.broadcast %cst_15 : f32 to vector<2x32xf32>
      %17 = arith.divf %15, %16 : vector<2x32xf32>
      %c0_16 = arith.constant 0 : index
      %c0_17 = arith.constant 0 : index
      %18 = vector.load %arg9[%c0_16, %c0_17] : memref<2x32xf32, #tpu.memory_space<vmem>>, vector<2x32xf32>
      %19 = tpu.concatenate %17, %18 in 0 : vector<2x32xf32>, vector<2x32xf32> -> vector<4x32xf32>
      %c0_18 = arith.constant 0 : index
      %c0_19 = arith.constant 0 : index
      %20 = vector.load %arg3[%c0_18, %c0_19] : memref<32x2xf32, #tpu.memory_space<vmem>>, vector<32x2xf32>
      %cst_20 = arith.constant dense<0.000000e+00> : vector<4x2xf32>
      %21 = tpu.matmul %19, %20, %cst_20 {dimension_numbers = #tpu.dot_dimension_numbers<[1], [0], [0], [1], [0, 0, 1, 1], [], []>} : vector<4x32xf32>, vector<32x2xf32>, vector<4x2xf32> -> vector<4x2xf32>
      %c0_21 = arith.constant 0 : index
      %c0_22 = arith.constant 0 : index
      %22 = vector.load %arg4[%c0_21, %c0_22] : memref<1x2xf32, #tpu.memory_space<vmem>>, vector<1x2xf32>
      %23 = vector.broadcast %22 : vector<1x2xf32> to vector<4x2xf32>
      %24 = arith.addf %21, %23 : vector<4x2xf32>
      %cst_23 = arith.constant 0.000000e+00 : f32
      %25 = vector.broadcast %cst_23 : f32 to vector<4x2xf32>
      %26 = arith.maximumf %24, %25 : vector<4x2xf32>
      %c0_24 = arith.constant 0 : index
      %c0_25 = arith.constant 0 : index
      %27 = vector.load %arg5[%c0_24, %c0_25] : memref<2x32xf32, #tpu.memory_space<vmem>>, vector<2x32xf32>
      %cst_26 = arith.constant dense<0.000000e+00> : vector<4x32xf32>
      %28 = tpu.matmul %26, %27, %cst_26 {dimension_numbers = #tpu.dot_dimension_numbers<[1], [0], [0], [1], [0, 0, 1, 1], [], []>} : vector<4x2xf32>, vector<2x32xf32>, vector<4x32xf32> -> vector<4x32xf32>
      %c0_27 = arith.constant 0 : index
      %c0_28 = arith.constant 0 : index
      %29 = vector.load %arg6[%c0_27, %c0_28] : memref<1x32xf32, #tpu.memory_space<vmem>>, vector<1x32xf32>
      %30 = vector.broadcast %29 : vector<1x32xf32> to vector<4x32xf32>
      %31 = arith.addf %28, %30 : vector<4x32xf32>
      %32 = vector.extract_strided_slice %31 {offsets = [0, 0], sizes = [2, 32], strides = [1, 1]} : vector<4x32xf32> to vector<2x32xf32>
      %33 = vector.extract_strided_slice %31 {offsets = [2, 0], sizes = [2, 32], strides = [1, 1]} : vector<4x32xf32> to vector<2x32xf32>
      %34 = arith.addf %32, %33 : vector<2x32xf32>
      %35 = arith.negf %34 : vector<2x32xf32>
      %36 = math.exp %35 : vector<2x32xf32>
      %cst_29 = arith.constant 1.000000e+00 : f32
      %37 = vector.broadcast %cst_29 : f32 to vector<2x32xf32>
      %38 = arith.addf %37, %36 : vector<2x32xf32>
      %39 = arith.divf %37, %38 : vector<2x32xf32>
      %c0_30 = arith.constant 0 : index
      %c0_31 = arith.constant 0 : index
      %40 = vector.load %arg7[%c0_30, %c0_31] : memref<2x32xf32, #tpu.memory_space<vmem>>, vector<2x32xf32>
      tpu.vector_store %arg7[%c0_30, %c0_31], %39 {strides = array<i32>} : memref<2x32xf32, #tpu.memory_space<vmem>>, vector<2x32xf32>,
    } else {
    }
    return
  }
  func.func @transform_0(%arg0: i32, %arg1: i32) -> (i32, i32, i32) {
    %c0_i32 = arith.constant 0 : i32
    %c0_i32_0 = arith.constant 0 : i32
    return %arg0, %c0_i32, %arg1 : i32, i32, i32
  }
  func.func @transform_1(%arg0: i32, %arg1: i32) -> (i32, i32) {
    %c0_i32 = arith.constant 0 : i32
    %c0_i32_0 = arith.constant 0 : i32
    %c0_i32_1 = arith.constant 0 : i32
    return %c0_i32, %c0_i32_0 : i32, i32
  }
  func.func @transform_2(%arg0: i32, %arg1: i32) -> (i32, i32) {
    %c0_i32 = arith.constant 0 : i32
    %c0_i32_0 = arith.constant 0 : i32
    %c0_i32_1 = arith.constant 0 : i32
    return %c0_i32, %c0_i32_0 : i32, i32
  }
  func.func @transform_3(%arg0: i32, %arg1: i32) -> (i32, i32) {
    %c0_i32 = arith.constant 0 : i32
    %c0_i32_0 = arith.constant 0 : i32
    %c0_i32_1 = arith.constant 0 : i32
    return %c0_i32, %c0_i32_0 : i32, i32
  }
  func.func @transform_4(%arg0: i32, %arg1: i32) -> (i32, i32) {
    %c0_i32 = arith.constant 0 : i32
    %c0_i32_0 = arith.constant 0 : i32
    %c0_i32_1 = arith.constant 0 : i32
    return %c0_i32, %c0_i32_0 : i32, i32
  }
  func.func @transform_5(%arg0: i32, %arg1: i32) -> (i32, i32) {
    %c0_i32 = arith.constant 0 : i32
    %c0_i32_0 = arith.constant 0 : i32
    return %arg0, %c0_i32 : i32, i32
  }
}

</mosaic_0001>

<llo_original>
// kernel: tpu_custom_call.1
$region0: #{tpu_custom_call.1}
  #allocation0 [shape = 'u32[]', space=smem, size = 0x4, offset = 0x4, fixed_abs, tag = 'smem constant byte address 0x4 - core index']
  #allocation1 [shape = 'u32[72,128]{1,0:T(1,128)}', space=vmem, size = 0x9000, scoped, tag = 'internal scratch']
  #allocation2 [shape = 'f32[2,32]{1,0:T(2,128)}', space=vmem, size = 0x400, scoped, tag = 'scratch operand']
  #allocation3 [shape = 'f32[2,32]{1,0:T(2,128)}', space=vmem, size = 0x400, scoped, tag = 'scratch operand']
  %s0 = inlined_call_operand.hbm [shape: f32[2,32,256], index: 0, kind: input, shape index: {}]
  %s1 = inlined_call_operand.vmem [shape: f32[32,2], index: 1, kind: input, shape index: {}]
  %s2 = inlined_call_operand.vmem [shape: f32[1,2], index: 2, kind: input, shape index: {}]
  %s3 = inlined_call_operand.vmem [shape: f32[2,32], index: 3, kind: input, shape index: {}]
  %s4 = inlined_call_operand.vmem [shape: f32[1,32], index: 4, kind: input, shape index: {}]
  %s5 = inlined_call_operand.hbm [shape: f32[2,32], index: 5, kind: output, shape index: {}]
  %s6 = sld [smem:[#allocation0]]
  $region65: #{tpu_custom_call.1} parent=0
    _
  %s8 = ssub.s32 1, %s6
  %s9 = scalar_select 0, %s8, %s6
  $region1: #{tpu_custom_call.1} parent=0
    #allocation4 [shape = 'u8[65536]{0}', space=vmem, size = 0x10000, scoped, tag = 'input window, operand 0']
    #allocation5 [shape = 's32[2]{0}', space=sflag, size = 0x8, scoped, tag = 'scoped memory for tpu_custom_call.1']
    #allocation6 [shape = 's32[2]{0}', space=sflag, size = 0x8, scoped, tag = 'scoped memory for tpu_custom_call.1']
    #allocation7 [shape = 'u8[1024]{0}', space=vmem, size = 0x400, scoped, tag = 'output window, operand 0, single buffered']
    %10 = vsyncpa [#allocation5], 0
    %s11 = scalar_lea.sflag [#allocation5], 1
    %12 = vsyncpa %s11, 0
    %13 = vsyncpa [#allocation6], 0
    loop: start=0, step=1, limit=4
    $region2: #{tpu_custom_call.1} parent=1 // loop_pre_header
      _
    $region3: #{tpu_custom_call.1} parent=1 // loop_header
      %s15 = sphi 0, %s19
      %p16 = scmp.ge.s32.totalorder %s15, 4
      %s22 = sphi 0, %s34
      %s23 = sphi 0, %s30
      %s24 = sphi 0, %s22
      %s25 = sphi 0, %s23
      %s26 = sphi 0, %s24
      %s27 = sphi 0, %s25
      %s39 = sphi 0, %s41
      %s42 = sphi 0, %s39
      %s43 = sphi 0, %s42
      %s59 = sphi 0, %s43
      %s63 = sphi 0, %s63
      %s65 = sphi 0, %s63
      %s66 = sphi 0, %s65
      %s80 = sphi 0, %s66
      %s84 = sphi 0, %s84
      %s86 = sphi 0, %s84
      %s87 = sphi 0, %s86
      %s101 = sphi 0, %s87
      %s105 = sphi 0, %s105
      %s107 = sphi 0, %s105
      %s108 = sphi 0, %s107
      %s122 = sphi 0, %s108
      %s126 = sphi 0, %s126
      %s128 = sphi 0, %s126
      %s129 = sphi 0, %s128
      %s143 = sphi 0, %s129
      %s149 = sphi 0, %s151
      %s152 = sphi 0, %s149
      %s153 = sphi 0, %s152
      %s169 = sphi 0, %s153
    $region4: #{tpu_custom_call.1} parent=1 // loop_header_branch
      %18 = sbr.rel (%p16) target = $region8
    $region5: #{tpu_custom_call.1} parent=1 // loop_body
      %s20 = ssub.s32 %s15, 1
      %s21 = ssub.s32 %s15, 2
      %s28 = sadd.s32 1, %s23
      %p29 = scmp.ge.s32.totalorder %s28, 2
      %s30 = scalar_select %p29, 0, %s28
      %s31 = sadd.s32 1, %s22
      %s32 = scalar_select %p29, %s31, %s22
      %p33 = scmp.ge.s32.totalorder %s32, 1
      %s34 = scalar_select %p33, 0, %s32
      %s35 = ssub.s32 %s22, %s34
      %s36 = ssub.s32 %s23, %s30
      %s37 = sor.u32 %s35, %s36
      %p38 = scmp.eq.s32.totalorder %s37, 0
      %s40 = sadd.s32 %s39, 1
      %s41 = scalar_select %p38, %s39, %s40
      %p44 = pneg %p38
      %p45 = scmp.eq.s32.totalorder %s15, 1
      %p46 = por %p44, %p45
      %p47 = scmp.ne.s32.totalorder %s39, %s42
      %p48 = scmp.eq.s32.totalorder %s15, 0
      %p49 = por %p47, %p48
      %p50 = scmp.ne.s32.totalorder %s39, %s42
      %p51 = scmp.eq.s32.totalorder %s20, 1
      %p52 = por %p50, %p51
      %p53 = scmp.ne.s32.totalorder %s42, %s43
      %p54 = scmp.eq.s32.totalorder %s20, 0
      %p55 = por %p53, %p54
      %p56 = scmp.ne.s32.totalorder %s42, %s43
      %p57 = scmp.eq.s32.totalorder %s21, 1
      %p58 = por %p56, %p57
      %p60 = scmp.ne.s32.totalorder %s43, %s59
      %p61 = scmp.eq.s32.totalorder %s21, 0
      %p62 = por %p60, %p61
      %s64 = sadd.s32 %s63, 1
      %p67 = scmp.eq.s32.totalorder %s15, 1
      %p68 = scmp.ne.s32.totalorder %s63, %s65
      %p69 = scmp.eq.s32.totalorder %s15, 0
      %p70 = por %p68, %p69
      %p71 = scmp.ne.s32.totalorder %s63, %s65
      %p72 = scmp.eq.s32.totalorder %s20, 1
      %p73 = por %p71, %p72
      %p74 = scmp.ne.s32.totalorder %s65, %s66
      %p75 = scmp.eq.s32.totalorder %s20, 0
      %p76 = por %p74, %p75
      %p77 = scmp.ne.s32.totalorder %s65, %s66
      %p78 = scmp.eq.s32.totalorder %s21, 1
      %p79 = por %p77, %p78
      %p81 = scmp.ne.s32.totalorder %s66, %s80
      %p82 = scmp.eq.s32.totalorder %s21, 0
      %p83 = por %p81, %p82
      %s85 = sadd.s32 %s84, 1
      %p88 = scmp.eq.s32.totalorder %s15, 1
      %p89 = scmp.ne.s32.totalorder %s84, %s86
      %p90 = scmp.eq.s32.totalorder %s15, 0
      %p91 = por %p89, %p90
      %p92 = scmp.ne.s32.totalorder %s84, %s86
      %p93 = scmp.eq.s32.totalorder %s20, 1
      %p94 = por %p92, %p93
      %p95 = scmp.ne.s32.totalorder %s86, %s87
      %p96 = scmp.eq.s32.totalorder %s20, 0
      %p97 = por %p95, %p96
      %p98 = scmp.ne.s32.totalorder %s86, %s87
      %p99 = scmp.eq.s32.totalorder %s21, 1
      %p100 = por %p98, %p99
      %p102 = scmp.ne.s32.totalorder %s87, %s101
      %p103 = scmp.eq.s32.totalorder %s21, 0
      %p104 = por %p102, %p103
      %s106 = sadd.s32 %s105, 1
      %p109 = scmp.eq.s32.totalorder %s15, 1
      %p110 = scmp.ne.s32.totalorder %s105, %s107
      %p111 = scmp.eq.s32.totalorder %s15, 0
      %p112 = por %p110, %p111
      %p113 = scmp.ne.s32.totalorder %s105, %s107
      %p114 = scmp.eq.s32.totalorder %s20, 1
      %p115 = por %p113, %p114
      %p116 = scmp.ne.s32.totalorder %s107, %s108
      %p117 = scmp.eq.s32.totalorder %s20, 0
      %p118 = por %p116, %p117
      %p119 = scmp.ne.s32.totalorder %s107, %s108
      %p120 = scmp.eq.s32.totalorder %s21, 1
      %p121 = por %p119, %p120
      %p123 = scmp.ne.s32.totalorder %s108, %s122
      %p124 = scmp.eq.s32.totalorder %s21, 0
      %p125 = por %p123, %p124
      %s127 = sadd.s32 %s126, 1
      %p130 = scmp.eq.s32.totalorder %s15, 1
      %p131 = scmp.ne.s32.totalorder %s126, %s128
      %p132 = scmp.eq.s32.totalorder %s15, 0
      %p133 = por %p131, %p132
      %p134 = scmp.ne.s32.totalorder %s126, %s128
      %p135 = scmp.eq.s32.totalorder %s20, 1
      %p136 = por %p134, %p135
      %p137 = scmp.ne.s32.totalorder %s128, %s129
      %p138 = scmp.eq.s32.totalorder %s20, 0
      %p139 = por %p137, %p138
      %p140 = scmp.ne.s32.totalorder %s128, %s129
      %p141 = scmp.eq.s32.totalorder %s21, 1
      %p142 = por %p140, %p141
      %p144 = scmp.ne.s32.totalorder %s129, %s143
      %p145 = scmp.eq.s32.totalorder %s21, 0
      %p146 = por %p144, %p145
      %s147 = ssub.s32 %s22, %s34
      %p148 = scmp.eq.s32.totalorder %s147, 0
      %s150 = sadd.s32 %s149, 1
      %s151 = scalar_select %p148, %s149, %s150
      %p154 = pneg %p148
      %p155 = scmp.eq.s32.totalorder %s15, 1
      %p156 = por %p154, %p155
      %p157 = scmp.ne.s32.totalorder %s149, %s152
      %p158 = scmp.eq.s32.totalorder %s15, 0
      %p159 = por %p157, %p158
      %p160 = scmp.ne.s32.totalorder %s149, %s152
      %p161 = scmp.eq.s32.totalorder %s20, 1
      %p162 = por %p160, %p161
      %p163 = scmp.ne.s32.totalorder %s152, %s153
      %p164 = scmp.eq.s32.totalorder %s20, 0
      %p165 = por %p163, %p164
      %p166 = scmp.ne.s32.totalorder %s152, %s153
      %p167 = scmp.eq.s32.totalorder %s21, 1
      %p168 = por %p166, %p167
      %p170 = scmp.ne.s32.totalorder %s153, %s169
      %p171 = scmp.eq.s32.totalorder %s21, 0
      %p172 = por %p170, %p171
      %p173 = scmp.le.s32.totalorder 1, %s15
      %p174 = scmp.lt.s32.totalorder %s15, 3
      %p175 = pnand %p173, %p174
      %p176 = pneg %p175
      // Predicated region
      $region9: #{tpu_custom_call.1} parent=5 // pred_check
        _
      $region10: #{tpu_custom_call.1} parent=5 // pred_check_branch
        %178 = sbr.rel (%p175) target = $region12
      $region11: #{tpu_custom_call.1} parent=5 // pred_region
        %s179 = ssub.s32 %s15, 1
        // Predicated region
        $region13: #{tpu_custom_call.1} parent=11 // pred_check
          %p180 = pneg %p76
        $region14: #{tpu_custom_call.1} parent=11 // pred_check_branch
          %182 = sbr.rel (%p180) target = $region16
        $region15: #{tpu_custom_call.1} parent=11 // pred_region
          _
        $region16: #{tpu_custom_call.1} parent=11 // pred_fallthru
          _
        // Predicated region
        $region17: #{tpu_custom_call.1} parent=11 // pred_check
          %p183 = pneg %p97
        $region18: #{tpu_custom_call.1} parent=11 // pred_check_branch
          %185 = sbr.rel (%p183) target = $region20
        $region19: #{tpu_custom_call.1} parent=11 // pred_region
          _
        $region20: #{tpu_custom_call.1} parent=11 // pred_fallthru
          _
        // Predicated region
        $region21: #{tpu_custom_call.1} parent=11 // pred_check
          %p186 = pneg %p118
        $region22: #{tpu_custom_call.1} parent=11 // pred_check_branch
          %188 = sbr.rel (%p186) target = $region24
        $region23: #{tpu_custom_call.1} parent=11 // pred_region
          _
        $region24: #{tpu_custom_call.1} parent=11 // pred_fallthru
          _
        // Predicated region
        $region25: #{tpu_custom_call.1} parent=11 // pred_check
          %p189 = pneg %p139
        $region26: #{tpu_custom_call.1} parent=11 // pred_check_branch
          %191 = sbr.rel (%p189) target = $region28
        $region27: #{tpu_custom_call.1} parent=11 // pred_region
          _
        $region28: #{tpu_custom_call.1} parent=11 // pred_fallthru
          _
      $region12: #{tpu_custom_call.1} parent=5 // pred_fallthru
        _
      %p192 = scmp.lt.s32.totalorder %s15, 2
      // Predicated region
      $region29: #{tpu_custom_call.1} parent=5 // pred_check
        %p193 = pneg %p192
      $region30: #{tpu_custom_call.1} parent=5 // pred_check_branch
        %195 = sbr.rel (%p193) target = $region32
      $region31: #{tpu_custom_call.1} parent=5 // pred_region
        // Predicated region
        $region33: #{tpu_custom_call.1} parent=31 // pred_check
          %p196 = pneg %p49
        $region34: #{tpu_custom_call.1} parent=31 // pred_check_branch
          %198 = sbr.rel (%p196) target = $region36
        $region35: #{tpu_custom_call.1} parent=31 // pred_region
          %s199 = sand.u32 %s39, 1
          %s200 = scalar_lea.sflag [#allocation5], %s199
          %s201 = sand.u32 %s39, 1
          %s202 = smul.addr %s201, 64
          %s203 = scalar_lea.vmem [#allocation4], %s202
          %s204 = smul.u32 2, %s22
          %206 = vsyncadd %s200, 0
          %s207 = smul.addr %s204, 8
          %s208 = sadd.s32 %s23, %s207
          %s209 = smul.addr %s208, 8
          %s210 = scalar_lea.hbm %s0, %s209
          %s211 = sshll.u32 %s210, 4
          %s212 = int_to_ptr.hbm [resolvable:$true] %s211
          %s213 = sshll.u32 %s203, 4
          %s214 = int_to_ptr.vmem [resolvable:$true] %s213
          %219 = dma.hbm_to_vmem [thread:$0]  %s212, 1024, %s214, %s200, 256, 128, 8
        $region36: #{tpu_custom_call.1} parent=31 // pred_fallthru
          _
      $region32: #{tpu_custom_call.1} parent=5 // pred_fallthru
        _
      %p220 = scmp.le.s32.totalorder 1, %s15
      %p221 = scmp.lt.s32.totalorder %s15, 3
      %p222 = pnand %p220, %p221
      %p223 = pneg %p222
      // Predicated region
      $region37: #{tpu_custom_call.1} parent=5 // pred_check
        _
      $region38: #{tpu_custom_call.1} parent=5 // pred_check_branch
        %225 = sbr.rel (%p222) target = $region40
      $region39: #{tpu_custom_call.1} parent=5 // pred_region
        %s226 = ssub.s32 %s15, 1
        %s227 = sand.u32 %s42, 1
        %s228 = scalar_lea.sflag [#allocation5], %s227
        %s229 = sand.u32 %s42, 1
        %s230 = smul.addr %s229, 64
        %s231 = scalar_lea.vmem [#allocation4], %s230
        // Predicated region
        $region41: #{tpu_custom_call.1} parent=39 // pred_check
          %p232 = pneg %p55
        $region42: #{tpu_custom_call.1} parent=39 // pred_check_branch
          %234 = sbr.rel (%p232) target = $region44
        $region43: #{tpu_custom_call.1} parent=39 // pred_region
          %236 = dma.done %s228, 1024
        $region44: #{tpu_custom_call.1} parent=39 // pred_fallthru
          _
        %s237 = sand.u32 %s42, 1
        %s238 = scalar_lea.sflag [#allocation5], %s237
        %s239 = sand.u32 %s42, 1
        %s240 = smul.addr %s239, 64
        %s241 = scalar_lea.vmem [#allocation4], %s240
        %p242 = pneg %p55
        %p243 = pneg %p52
        %p244 = pneg %p76
        %p245 = pneg %p73
        %p246 = pneg %p97
        %p247 = pneg %p94
        %p248 = pneg %p118
        %p249 = pneg %p115
        %p250 = pneg %p139
        %p251 = pneg %p136
        %p252 = pneg %p165
        %p253 = pneg %p162
        %s254 = smul.u32 2, %s24
        %p255 = scmp.eq.s32.totalorder %s25, 0
        // Predicated region
        $region45: #{tpu_custom_call.1} parent=39 // pred_check
          %p256 = pneg %p255
        $region46: #{tpu_custom_call.1} parent=39 // pred_check_branch
          %258 = sbr.rel (%p256) target = $region48
        $region47: #{tpu_custom_call.1} parent=39 // pred_region
          %vm259 = vcmask 254976
          %260 = vst.msk [vmem:[#allocation2] sm:$0x3] %vm259, 0.0
          %261 = vst.msk [vmem:[#allocation3] sm:$0x3] %vm259, -inf
        $region48: #{tpu_custom_call.1} parent=39 // pred_fallthru
          _
        %v262 = vld [vmem:[%s231] sm:$0xff]
        %v263 = vld [vmem:[%s231 + $0x8] sm:$0xff]
        %v264 = vld [vmem:[%s231 + $0x10] sm:$0xff]
        %v265 = vld [vmem:[%s231 + $0x18] sm:$0xff]
        %v266 = vld [vmem:[%s231 + $0x20] sm:$0xff]
        %v267 = vld [vmem:[%s231 + $0x28] sm:$0xff]
        %v268 = vld [vmem:[%s231 + $0x30] sm:$0xff]
        %v269 = vld [vmem:[%s231 + $0x38] sm:$0xff]
        %v270 = vld [vmem:[#allocation2] sm:$0x3]
        %271 = vadd.xlane.f32.xlu0 %v262
        %v272 = vpop.xlane.xlu0 %271
        %273 = vadd.xlane.f32.xlu0 %v263
        %v274 = vpop.xlane.xlu0 %273
        %275 = vadd.xlane.f32.xlu0 %v264
        %v276 = vpop.xlane.xlu0 %275
        %277 = vadd.xlane.f32.xlu0 %v265
        %v278 = vpop.xlane.xlu0 %277
        %279 = vadd.xlane.f32.xlu0 %v266
        %v280 = vpop.xlane.xlu0 %279
        %281 = vadd.xlane.f32.xlu0 %v267
        %v282 = vpop.xlane.xlu0 %281
        %283 = vadd.xlane.f32.xlu0 %v268
        %v284 = vpop.xlane.xlu0 %283
        %285 = vadd.xlane.f32.xlu0 %v269
        %v286 = vpop.xlane.xlu0 %285
        %v295 = vlaneseq
        %v296 = vand.u32 %v295, 127
        %v297 = vperm.slane %v272, %v296
        %v298 = vadd.s32 %v296, 4294967288
        %v299 = vperm.slane %v274, %v298
        %vm300 = vcmask 130112
        %v301 = vsel %vm300, %v299, %v297
        %v302 = vadd.s32 %v296, 4294967280
        %v303 = vperm.slane %v276, %v302
        %vm304 = vcmask 195712
        %v305 = vsel %vm304, %v303, %v301
        %v306 = vadd.s32 %v296, 4294967272
        %v307 = vperm.slane %v278, %v306
        %vm308 = vcmask 261312
        %v309 = vsel %vm308, %v307, %v305
        %v310 = vperm.slane %v280, %v296
        %v311 = vperm.slane %v282, %v298
        %v312 = vsel %vm300, %v311, %v310
        %v313 = vperm.slane %v284, %v302
        %v314 = vsel %vm304, %v313, %v312
        %v315 = vperm.slane %v286, %v306
        %v316 = vsel %vm308, %v315, %v314
        %vm317 = vcmask 1041409
        %v318 = vsel %vm317, %v316, %v309
        %v320 = vadd.f32 %v270, %v318
        %vm321 = vcmask 254976
        %322 = vst.msk [vmem:[#allocation2] sm:$0x3] %vm321, %v320
        %v323 = vld [vmem:[#allocation3] sm:$0x3]
        %324 = vmax.xlane.f32.xlu0 %v262
        %v325 = vpop.xlane.xlu0 %324
        %326 = vmax.xlane.f32.xlu0 %v263
        %v327 = vpop.xlane.xlu0 %326
        %328 = vmax.xlane.f32.xlu0 %v264
        %v329 = vpop.xlane.xlu0 %328
        %330 = vmax.xlane.f32.xlu0 %v265
        %v331 = vpop.xlane.xlu0 %330
        %332 = vmax.xlane.f32.xlu0 %v266
        %v333 = vpop.xlane.xlu0 %332
        %334 = vmax.xlane.f32.xlu0 %v267
        %v335 = vpop.xlane.xlu0 %334
        %336 = vmax.xlane.f32.xlu0 %v268
        %v337 = vpop.xlane.xlu0 %336
        %338 = vmax.xlane.f32.xlu0 %v269
        %v339 = vpop.xlane.xlu0 %338
        %v348 = vperm.slane %v325, %v296
        %v349 = vperm.slane %v327, %v298
        %v350 = vsel %vm300, %v349, %v348
        %v351 = vperm.slane %v329, %v302
        %v352 = vsel %vm304, %v351, %v350
        %v353 = vperm.slane %v331, %v306
        %v354 = vsel %vm308, %v353, %v352
        %v355 = vperm.slane %v333, %v296
        %v356 = vperm.slane %v335, %v298
        %v357 = vsel %vm300, %v356, %v355
        %v358 = vperm.slane %v337, %v302
        %v359 = vsel %vm304, %v358, %v357
        %v360 = vperm.slane %v339, %v306
        %v361 = vsel %vm308, %v360, %v359
        %v362 = vsel %vm317, %v361, %v354
        %v364 = vmax.f32 %v323, %v362
        %365 = vst.msk [vmem:[#allocation3] sm:$0x3] %vm321, %v364
        %p366 = scmp.eq.s32.totalorder %s25, 1
        // Predicated region
        $region49: #{tpu_custom_call.1} parent=39 // pred_check
          %p367 = pneg %p366
        $region50: #{tpu_custom_call.1} parent=39 // pred_check_branch
          %369 = sbr.rel (%p367) target = $region52
        $region51: #{tpu_custom_call.1} parent=39 // pred_region
          %v370 = vld [vmem:[#allocation2] sm:$0x3]
          %v371 = vrcp.pop 256.0
          %v372 = vmul.f32 256.0, %v371
          %v373 = vsub.f32 1.0, %v372
          %v374 = vmul.f32 %v371, %v373
          %v375 = vadd.f32 %v371, %v374
          %vm376 = vweird.f32 %v371
          %v377 = vsel %vm376, %v371, %v375
          %v378 = vmul.f32 %v370, %v377
          %v379 = vld [vmem:[#allocation3] sm:$0x3]
          %v381 = vrot.slane %v379, 6
          %vm383 = vcmask 1041408
          %v384 = vsel %vm383, %v378, %v381
          %v385 = vld [vmem:[%s1] sm:$0xff]
          %v386 = vld [vmem:[%s1 + $0x8] sm:$0xff]
          %v387 = vld [vmem:[%s1 + $0x10] sm:$0xff]
          %v388 = vld [vmem:[%s1 + $0x18] sm:$0xff]
          %v389 = vld [vmem:[%s2] sm:$0x1]
          %v391 = vperm.slane %v389, 0
          %vm393 = vcmask 261120
          %v395 = vsel %vm393, %v384, 0
          %397 = vmatpush.msra.mxu0 0.0
          %398 = vmatpush.msra.mxu0 0.0
          %399 = vmatpush.msra.mxu0 0.0
          %400 = vmatpush.msra.mxu0 0.0
          %401 = vmatpush.msra.mxu0 0.0
          %402 = vmatpush.msra.mxu0 0.0
          %403 = vmatpush.msra.mxu0 0.0
          %404 = vmatpush.msra.mxu0 0.0
          %405 = vmatpush.msra.mxu0 0.0
          %406 = vmatpush.msra.mxu0 0.0
          %407 = vmatpush.msra.mxu0 0.0
          %408 = vmatpush.msra.mxu0 0.0
          %409 = vmatpush.msra.mxu0 %v388
          %410 = vmatpush.msra.mxu0 %v387
          %411 = vmatpush.msra.mxu0 %v386
          %412 = vmatpush.msra.mxu0 %v385
          %413 = vmatmul.f32.gmra.mxu0 %v395
          %v414 = vpop.f32.mrf.mxu0
          %v415 = vadd.f32 %v391, %v414
          %416 = vdwg.mxu0
          %v417 = vmax.f32 %v415, 0.0
          %v418 = vld [vmem:[%s3] sm:$0x3]
          %v419 = vld [vmem:[%s4] sm:$0x1]
          %v421 = vperm.slane %v419, 0
          %vm423 = vcmask 15360
          %v425 = vsel %vm423, %v417, 0
          %v428 = vsel %vm383, %v418, 0
          %430 = vmatpush.msra.mxu0 0.0
          %431 = vmatpush.msra.mxu0 0.0
          %432 = vmatpush.msra.mxu0 0.0
          %433 = vmatpush.msra.mxu0 0.0
          %434 = vmatpush.msra.mxu0 0.0
          %435 = vmatpush.msra.mxu0 0.0
          %436 = vmatpush.msra.mxu0 0.0
          %437 = vmatpush.msra.mxu0 0.0
          %438 = vmatpush.msra.mxu0 0.0
          %439 = vmatpush.msra.mxu0 0.0
          %440 = vmatpush.msra.mxu0 0.0
          %441 = vmatpush.msra.mxu0 0.0
          %442 = vmatpush.msra.mxu0 0.0
          %443 = vmatpush.msra.mxu0 0.0
          %444 = vmatpush.msra.mxu0 0.0
          %445 = vmatpush.msra.mxu0 %v428
          %446 = vmatmul.f32.gmra.mxu0 %v425
          %v447 = vpop.f32.mrf.mxu0
          %v448 = vadd.f32 %v421, %v447
          %449 = vdwg.mxu0
          %v451 = vrot.slane %v448, 2
          %v453 = vadd.f32 %v448, %v451
          %v454 = vxor.u32 %v453, 2147483648
          %v455 = vmul.f32 %v454, 1.442695
          %v456 = vpow.pop %v455
          %v457 = vadd.f32 %v456, 1.0
          %v458 = vrcp.pop %v457
          %v459 = vmul.f32 %v457, %v458
          %v460 = vsub.f32 1.0, %v459
          %v461 = vmul.f32 %v458, %v460
          %v462 = vadd.f32 %v458, %v461
          %vm463 = vweird.f32 %v457
          %vm464 = vweird.f32 %v458
          %vm465 = vmor %vm463, %vm464
          %v466 = vsel %vm465, %v458, %v462
          %v467 = vand.u32 2147483647, %v457
          %vm468 = vcmp.eq.f32.partialorder %v467, 8.507059e+37
          %v469 = vand.u32 %v457, 2147483648
          %v470 = vor.u32 1.1754944e-38, %v469
          %v471 = vsel %vm468, %v470, %v466
          %v472 = vmul.f32 1.0, %v471
          %473 = vst.msk [vmem:[#allocation7] sm:$0x3] %vm321, %v472
        $region52: #{tpu_custom_call.1} parent=39 // pred_fallthru
          _
        // Predicated region
        $region53: #{tpu_custom_call.1} parent=39 // pred_check
          %p474 = pneg %p162
        $region54: #{tpu_custom_call.1} parent=39 // pred_check_branch
          %476 = sbr.rel (%p474) target = $region56
        $region55: #{tpu_custom_call.1} parent=39 // pred_region
          %478 = vsyncadd [#allocation6], 0
          %s479 = smul.addr %s24, 2
          %s480 = scalar_lea.hbm %s5, %s479
          %s482 = sshll.u32 [#allocation7], 4
          %s483 = int_to_ptr.vmem [resolvable:$true] %s482
          %s484 = sshll.u32 %s480, 4
          %s485 = int_to_ptr.hbm [resolvable:$true] %s484
          %487 = dma.vmem_to_hbm [thread:$0]  %s483, 32, %s485, [#allocation6]
        $region56: #{tpu_custom_call.1} parent=39 // pred_fallthru
          _
        // Predicated region
        $region57: #{tpu_custom_call.1} parent=39 // pred_check
          %p488 = pneg %p162
        $region58: #{tpu_custom_call.1} parent=39 // pred_check_branch
          %490 = sbr.rel (%p488) target = $region60
        $region59: #{tpu_custom_call.1} parent=39 // pred_region
          %492 = dma.done [#allocation6], 32
        $region60: #{tpu_custom_call.1} parent=39 // pred_fallthru
          _
      $region40: #{tpu_custom_call.1} parent=5 // pred_fallthru
        _
      %p493 = scmp.le.s32.totalorder 2, %s15
      // Predicated region
      $region61: #{tpu_custom_call.1} parent=5 // pred_check
        %p494 = pneg %p493
      $region62: #{tpu_custom_call.1} parent=5 // pred_check_branch
        %496 = sbr.rel (%p494) target = $region64
      $region63: #{tpu_custom_call.1} parent=5 // pred_region
        %s497 = ssub.s32 %s15, 2
      $region64: #{tpu_custom_call.1} parent=5 // pred_fallthru
        _
    $region6: #{tpu_custom_call.1} parent=1 // loop_footer
      %s19 = sadd.s32 1, %s15
    $region7: #{tpu_custom_call.1} parent=1 // loop_footer_branch
      %14 = sbr.rel target = $region3
    $region8: #{tpu_custom_call.1} parent=1 // loop_exit
      _
    %498 = vsyncpa [#allocation5], 1
    %s499 = scalar_lea.sflag [#allocation5], 1
    %500 = vsyncpa %s499, 1
    %501 = vsyncpa [#allocation6], 1
    %s502 = scalar_lea.sflag [#allocation6], 1
    %503 = vsyncpa %s502, 1

</llo_original>
